<compile_context>
chip_gen: v7x
topology: tpu7x:2x2x1
jax: 0.10.0
libtpu: 0.0.40
codegen_flags: <defaults>
</compile_context>

<pallas_src>
import functools

import jax
import jax.numpy as jnp
from jax.experimental import pallas as pl
from jax.experimental.pallas import tpu as pltpu


# ----------------------------- Pallas kernel --------------------------------

def attention_head_kernel(hl_ref, hp_ref, w1_ref, b1_ref, w2t_ref, b2_ref,
                          rw_ref, rb_ref, out_ref, m_sc, l_sc, ctx_sc):
    """Attention pooling head over one (batch element, sequence tile).

    hl_ref : (S_t, H)  bf16 VMEM   hs[-1] tile
    hp_ref : (S_t, H)  bf16 VMEM   hs[-2] tile
    w1_ref : (H, A)    f32  VMEM   attention Linear(H, 512) weight
    b1_ref : (1, A)    f32  VMEM   attention Linear(H, 512) bias
    w2t_ref: (1, A)    f32  VMEM   attention Linear(512, 1) weight (transposed)
    b2_ref : (1,)      f32  SMEM   attention Linear(512, 1) bias
    rw_ref : (1, H)    f32  VMEM   regressor Linear(H, 1) weight
    rb_ref : (1,)      f32  SMEM   regressor Linear(H, 1) bias
    out_ref: (1, 1, 1) f32  VMEM   regression output for this batch element
    m_sc   : (1, 1)    f32  VMEM   running softmax max
    l_sc   : (1, 1)    f32  VMEM   running softmax denominator
    ctx_sc : (1, H)    f32  VMEM   running (unnormalised) context vector
    """
    si = pl.program_id(1)
    n_si = pl.num_programs(1)

    @pl.when(si == 0)
    def _():
        m_sc[...] = jnp.full(m_sc.shape, -jnp.inf, jnp.float32)
        l_sc[...] = jnp.zeros(l_sc.shape, jnp.float32)
        ctx_sc[...] = jnp.zeros(ctx_sc.shape, jnp.float32)

    # mean(stack([hs[-1], hs[-2], hs[-1]])) == (2*h_last + h_prev) / 3,
    # folded into two scalar multiplies (bf16 -> f32 upcast, no tensor divide).
    x = (hl_ref[...].astype(jnp.float32) * jnp.float32(2.0 / 3.0)
         + hp_ref[...].astype(jnp.float32) * jnp.float32(1.0 / 3.0))      # (S_t, H)

    # attention scores: tanh(x @ W1 + b1) @ W2 + b2
    hidden = jnp.tanh(
        jnp.dot(x, w1_ref[...], preferred_element_type=jnp.float32)
        + b1_ref[...])                                                    # (S_t, A)
    # Linear(512, 1) kept off the MXU: VPU multiply + lane reduce.
    score = (jnp.sum(hidden * w2t_ref[...], axis=-1, keepdims=True)
             + b2_ref[0])                                                 # (S_t, 1)

    # online softmax over sequence tiles + streaming weighted sum of x
    m_prev = m_sc[...]                                                    # (1, 1)
    m_new = jnp.maximum(m_prev, jnp.max(score, axis=0, keepdims=True))    # (1, 1)
    alpha = jnp.exp(m_prev - m_new)                                       # (1, 1)
    p = jnp.exp(score - m_new)                                            # (S_t, 1)
    l_sc[...] = alpha * l_sc[...] + jnp.sum(p, axis=0, keepdims=True)
    ctx_sc[...] = alpha * ctx_sc[...] + jnp.sum(p * x, axis=0, keepdims=True)
    m_sc[...] = m_new

    @pl.when(si == n_si - 1)
    def _():
        inv_l = pl.reciprocal(l_sc[...], approx=True)                     # (1, 1)
        ctx = ctx_sc[...] * inv_l                                         # (1, H)
        # regressor Linear(H, 1): VPU multiply + lane reduce (no MXU matvec)
        res = (jnp.sum(ctx * rw_ref[...], axis=-1, keepdims=True)
               + rb_ref[0])                                               # (1, 1)
        out_ref[0] = res


def attention_pool_head(h_last, h_prev, att_w1, att_b1, att_w2, att_b2,
                        reg_w, reg_b, *, seq_tile=None):
    """h_last/h_prev: (B, S, H) (bf16 or f32). Returns (B, 1) f32."""
    B, S, H = h_last.shape
    A = att_w1.shape[1]
    if seq_tile is None:
        seq_tile = min(S, 512)
    # TODO(synk): ragged / non-divisible sequence lengths would need a masked tail tile.
    assert S % seq_tile == 0, "S must be divisible by seq_tile"
    n_seq_tiles = S // seq_tile

    att_b1_2d = att_b1.reshape(1, A).astype(jnp.float32)
    att_w2_t = att_w2.reshape(1, A).astype(jnp.float32)   # (A,1) -> (1,A)
    reg_w_2d = reg_w.reshape(1, H).astype(jnp.float32)

    out3 = pl.pallas_call(
        attention_head_kernel,
        out_shape=jax.ShapeDtypeStruct((B, 1, 1), jnp.float32),
        grid_spec=pltpu.PrefetchScalarGridSpec(
            num_scalar_prefetch=0,
            grid=(B, n_seq_tiles),
            in_specs=[
                pl.BlockSpec((None, seq_tile, H), lambda bi, si: (bi, si, 0)),  # hs[-1]
                pl.BlockSpec((None, seq_tile, H), lambda bi, si: (bi, si, 0)),  # hs[-2]
                pl.BlockSpec((H, A), lambda bi, si: (0, 0)),                    # att W1
                pl.BlockSpec((1, A), lambda bi, si: (0, 0)),                    # att b1
                pl.BlockSpec((1, A), lambda bi, si: (0, 0)),                    # att W2^T
                pl.BlockSpec(memory_space=pltpu.SMEM),                          # att b2
                pl.BlockSpec((1, H), lambda bi, si: (0, 0)),                    # reg W
                pl.BlockSpec(memory_space=pltpu.SMEM),                          # reg b
            ],
            out_specs=pl.BlockSpec((1, 1, 1), lambda bi, si: (bi, 0, 0)),
            scratch_shapes=[
                pltpu.VMEM((1, 1), jnp.float32),   # running max
                pltpu.VMEM((1, 1), jnp.float32),   # running denom
                pltpu.VMEM((1, H), jnp.float32),   # running context
            ],
        ),
        compiler_params=pltpu.CompilerParams(
            dimension_semantics=("parallel", "arbitrary"),
            vmem_limit_bytes=48 * 1024 * 1024,
        ),
    )(h_last, h_prev, att_w1.astype(jnp.float32), att_b1_2d, att_w2_t,
      att_b2.astype(jnp.float32), reg_w_2d, reg_b.astype(jnp.float32))
    return out3.reshape(B, 1)


# ------------------- tiny deterministic RoBERTa-style encoder ----------------
# TODO(synk): real model loads pretrained RoBERTa weights; here the backbone is
# a small random-init transformer encoder purely to produce hidden_states.

def _layer_norm(x, g, b, eps=1e-5):
    mu = jnp.mean(x, -1, keepdims=True)
    var = jnp.var(x, -1, keepdims=True)
    return (x - mu) * jax.lax.rsqrt(var + eps) * g + b


def _encoder_layer(x, mask_bias, p, num_heads):
    B, S, H = x.shape
    d = H // num_heads
    q = x @ p["wq"] + p["bq"]
    k = x @ p["wk"] + p["bk"]
    v = x @ p["wv"] + p["bv"]

    def split(t):
        return t.reshape(B, S, num_heads, d).transpose(0, 2, 1, 3)

    q, k, v = split(q), split(k), split(v)
    scores = jnp.einsum("bhqd,bhkd->bhqk", q, k) / jnp.sqrt(d) + mask_bias
    attn = jax.nn.softmax(scores, axis=-1)
    ctx = jnp.einsum("bhqk,bhkd->bhqd", attn, v).transpose(0, 2, 1, 3).reshape(B, S, H)
    x = _layer_norm(x + ctx @ p["wo"] + p["bo"], p["ln1_g"], p["ln1_b"])
    ff = jax.nn.gelu(x @ p["w1"] + p["b1"]) @ p["w2"] + p["b2"]
    return _layer_norm(x + ff, p["ln2_g"], p["ln2_b"])


def make_backbone_params(key, vocab, max_pos, H, FF, num_layers):
    ks = iter(jax.random.split(key, 4 + 16 * num_layers))
    nrm = lambda shape: jax.random.normal(next(ks), shape, jnp.float32) * 0.02
    params = {
        "word_emb": nrm((vocab, H)),
        "pos_emb": nrm((max_pos, H)),
        "emb_ln_g": jnp.ones((H,), jnp.float32),
        "emb_ln_b": jnp.zeros((H,), jnp.float32),
        "layers": [],
    }
    for _ in range(num_layers):
        params["layers"].append({
            "wq": nrm((H, H)), "bq": jnp.zeros((H,), jnp.float32),
            "wk": nrm((H, H)), "bk": jnp.zeros((H,), jnp.float32),
            "wv": nrm((H, H)), "bv": jnp.zeros((H,), jnp.float32),
            "wo": nrm((H, H)), "bo": jnp.zeros((H,), jnp.float32),
            "ln1_g": jnp.ones((H,), jnp.float32), "ln1_b": jnp.zeros((H,), jnp.float32),
            "w1": nrm((H, FF)), "b1": jnp.zeros((FF,), jnp.float32),
            "w2": nrm((FF, H)), "b2": jnp.zeros((H,), jnp.float32),
            "ln2_g": jnp.ones((H,), jnp.float32), "ln2_b": jnp.zeros((H,), jnp.float32),
        })
    return params


def make_head_params(key, H, A):
    ks = iter(jax.random.split(key, 6))
    nrm = lambda shape, s: jax.random.normal(next(ks), shape, jnp.float32) * s
    return {
        "att_w1": nrm((H, A), 0.02),
        "att_b1": nrm((A,), 0.02),
        "att_w2": nrm((A, 1), 0.02),
        "att_b2": nrm((1,), 0.02),
        "reg_w": nrm((1, H), 0.02),
        "reg_b": nrm((1,), 0.02),
    }


def backbone_hidden_states(params, input_ids, attention_mask, num_heads):
    B, S = input_ids.shape
    x = params["word_emb"][input_ids] + params["pos_emb"][:S][None, :, :]
    x = _layer_norm(x, params["emb_ln_g"], params["emb_ln_b"])
    mask_bias = (1.0 - attention_mask.astype(jnp.float32))[:, None, None, :] * -1e4
    hidden_states = [x]
    for lp in params["layers"]:
        x = _encoder_layer(x, mask_bias, lp, num_heads)
        hidden_states.append(x)
    return hidden_states        # python list — no jnp.stack HBM round trip


# pure-JAX reference of the pooled head, for a correctness check
def head_reference(h_last, h_prev, att_w1, att_b1, att_w2, att_b2, reg_w, reg_b):
    x = (2.0 * h_last + h_prev) / 3.0                 # mean(stack([hs[-1],hs[-2],hs[-1]]))
    hidden = jnp.tanh(x @ att_w1 + att_b1)            # (B, S, A)
    score = hidden @ att_w2 + att_b2                  # (B, S, 1)
    w = jax.nn.softmax(score, axis=1)                 # softmax over sequence
    ctx = jnp.sum(w * x, axis=1)                      # (B, H)
    return ctx @ reg_w.T + reg_b                      # (B, 1)


# ----------------------------------- main ------------------------------------

if __name__ == "__main__":
    B, S, H = 2, 32, 128          # H multiple of 128 (lane-dense), S = 2 sequence tiles
    SEQ_TILE = 16                  # bf16-friendly (multiple of 16 sublanes)
    NUM_LAYERS, NUM_HEADS, FF = 3, 4, 256
    VOCAB, MAX_POS = 100, 64
    ATT_HIDDEN = 512               # fixed 512 in the original module

    key = jax.random.PRNGKey(0)
    k_backbone, k_head, k_ids = jax.random.split(key, 3)
    bb_params = make_backbone_params(k_backbone, VOCAB, MAX_POS, H, FF, NUM_LAYERS)
    head = make_head_params(k_head, H, ATT_HIDDEN)

    input_ids = jax.random.randint(k_ids, (B, S), 0, VOCAB)
    attention_mask = jnp.ones((B, S), jnp.float32)

    hidden_states = backbone_hidden_states(bb_params, input_ids, attention_mask, NUM_HEADS)
    # hs[-1], hs[-2] streamed to the head in bf16 (f32 accumulation in-kernel)
    h_last = hidden_states[-1].astype(jnp.bfloat16)
    h_prev = hidden_states[-2].astype(jnp.bfloat16)

    out = attention_pool_head(h_last, h_prev,
                              head["att_w1"], head["att_b1"],
                              head["att_w2"], head["att_b2"],
                              head["reg_w"], head["reg_b"],
                              seq_tile=SEQ_TILE)
    out = jax.block_until_ready(out)

    ref = head_reference(h_last.astype(jnp.float32), h_prev.astype(jnp.float32),
                         head["att_w1"], head["att_b1"],
                         head["att_w2"], head["att_b2"],
                         head["reg_w"], head["reg_b"])
    assert out.shape == (B, 1)
    assert jnp.allclose(out, ref, atol=1e-2, rtol=1e-2), (out, ref)

    print("KERNEL_OK")
</pallas_src>

<mosaic_0001>
module attributes {stable_mosaic.version = 11 : i64} {
  func.func @attention_head_kernel(%arg0: i32, %arg1: i32, %arg2: memref<1x16x128xbf16, #tpu.memory_space<vmem>>, %arg3: memref<1x16x128xbf16, #tpu.memory_space<vmem>>, %arg4: memref<128x512xf32, #tpu.memory_space<vmem>>, %arg5: memref<1x512xf32, #tpu.memory_space<vmem>>, %arg6: memref<1x512xf32, #tpu.memory_space<vmem>>, %arg7: memref<1xf32, #tpu.memory_space<smem>>, %arg8: memref<1x128xf32, #tpu.memory_space<vmem>>, %arg9: memref<1xf32, #tpu.memory_space<smem>>, %arg10: memref<1x1x1xf32, #tpu.memory_space<vmem>>, %arg11: memref<1x1xf32, #tpu.memory_space<vmem>>, %arg12: memref<1x1xf32, #tpu.memory_space<vmem>>, %arg13: memref<1x128xf32, #tpu.memory_space<vmem>>) attributes {dimension_semantics = [#tpu.dimension_semantics<parallel>, #tpu.dimension_semantics<arbitrary>], iteration_bounds = array<i64: 2, 2>, scalar_prefetch = 0 : i64, scratch_operands = 3 : i64, tpu.core_type = #tpu.core_type<tc>, window_params = [{transform_indices = @transform_0, window_bounds = array<i64: 1, 16, 128>}, {transform_indices = @transform_1, window_bounds = array<i64: 1, 16, 128>}, {pipeline_mode = #tpu.pipeline_mode<synchronous>, transform_indices = @transform_2, window_bounds = array<i64: 128, 512>}, {pipeline_mode = #tpu.pipeline_mode<synchronous>, transform_indices = @transform_3, window_bounds = array<i64: 1, 512>}, {pipeline_mode = #tpu.pipeline_mode<synchronous>, transform_indices = @transform_4, window_bounds = array<i64: 1, 512>}, {transform_indices = @transform_5, window_bounds = array<i64: 1>}, {pipeline_mode = #tpu.pipeline_mode<synchronous>, transform_indices = @transform_6, window_bounds = array<i64: 1, 128>}, {transform_indices = @transform_7, window_bounds = array<i64: 1>}, {transform_indices = @transform_8, window_bounds = array<i64: 1, 1, 1>}]} {
    %c0_i32 = arith.constant 0 : i32
    %0 = arith.cmpi eq, %arg1, %c0_i32 : i32
    %1 = arith.extui %0 : i1 to i32
    %c0_i32_0 = arith.constant 0 : i32
    %2 = arith.cmpi ne, %1, %c0_i32_0 : i32
    scf.if %2 {
      %cst_32 = arith.constant 0xFF800000 : f32
      %56 = vector.broadcast %cst_32 : f32 to vector<1x1xf32>
      %c0_33 = arith.constant 0 : index
      %c0_34 = arith.constant 0 : index
      %57 = vector.load %arg11[%c0_33, %c0_34] : memref<1x1xf32, #tpu.memory_space<vmem>>, vector<1x1xf32>
      tpu.vector_store %arg11[%c0_33, %c0_34], %56 {strides = array<i32>} : memref<1x1xf32, #tpu.memory_space<vmem>>, vector<1x1xf32>,
      %cst_35 = arith.constant 0.000000e+00 : f32
      %58 = vector.broadcast %cst_35 : f32 to vector<1x1xf32>
      %c0_36 = arith.constant 0 : index
      %c0_37 = arith.constant 0 : index
      %59 = vector.load %arg12[%c0_36, %c0_37] : memref<1x1xf32, #tpu.memory_space<vmem>>, vector<1x1xf32>
      tpu.vector_store %arg12[%c0_36, %c0_37], %58 {strides = array<i32>} : memref<1x1xf32, #tpu.memory_space<vmem>>, vector<1x1xf32>,
      %cst_38 = arith.constant 0.000000e+00 : f32
      %60 = vector.broadcast %cst_38 : f32 to vector<1x128xf32>
      %c0_39 = arith.constant 0 : index
      %c0_40 = arith.constant 0 : index
      %61 = vector.load %arg13[%c0_39, %c0_40] : memref<1x128xf32, #tpu.memory_space<vmem>>, vector<1x128xf32>
      tpu.vector_store %arg13[%c0_39, %c0_40], %60 {strides = array<i32>} : memref<1x128xf32, #tpu.memory_space<vmem>>, vector<1x128xf32>,
    } else {
    }
    %c0 = arith.constant 0 : index
    %c0_1 = arith.constant 0 : index
    %c0_2 = arith.constant 0 : index
    %3 = vector.load %arg2[%c0, %c0_1, %c0_2] : memref<1x16x128xbf16, #tpu.memory_space<vmem>>, vector<1x16x128xbf16>
    %4 = vector.shape_cast %3 : vector<1x16x128xbf16> to vector<16x128xbf16>
    %5 = arith.extf %4 : vector<16x128xbf16> to vector<16x128xf32>
    %cst = arith.constant 0.666666686 : f32
    %6 = vector.broadcast %cst : f32 to vector<16x128xf32>
    %7 = arith.mulf %5, %6 : vector<16x128xf32>
    %c0_3 = arith.constant 0 : index
    %c0_4 = arith.constant 0 : index
    %c0_5 = arith.constant 0 : index
    %8 = vector.load %arg3[%c0_3, %c0_4, %c0_5] : memref<1x16x128xbf16, #tpu.memory_space<vmem>>, vector<1x16x128xbf16>
    %9 = vector.shape_cast %8 : vector<1x16x128xbf16> to vector<16x128xbf16>
    %10 = arith.extf %9 : vector<16x128xbf16> to vector<16x128xf32>
    %cst_6 = arith.constant 0.333333343 : f32
    %11 = vector.broadcast %cst_6 : f32 to vector<16x128xf32>
    %12 = arith.mulf %10, %11 : vector<16x128xf32>
    %13 = arith.addf %7, %12 : vector<16x128xf32>
    %c0_7 = arith.constant 0 : index
    %c0_8 = arith.constant 0 : index
    %14 = vector.load %arg4[%c0_7, %c0_8] : memref<128x512xf32, #tpu.memory_space<vmem>>, vector<128x512xf32>
    %cst_9 = arith.constant dense<0.000000e+00> : vector<16x512xf32>
    %15 = tpu.matmul %13, %14, %cst_9 {dimension_numbers = #tpu.dot_dimension_numbers<[1], [0], [0], [1], [0, 0, 1, 1], [], []>} : vector<16x128xf32>, vector<128x512xf32>, vector<16x512xf32> -> vector<16x512xf32>
    %c0_10 = arith.constant 0 : index
    %c0_11 = arith.constant 0 : index
    %16 = vector.load %arg5[%c0_10, %c0_11] : memref<1x512xf32, #tpu.memory_space<vmem>>, vector<1x512xf32>
    %17 = vector.broadcast %16 : vector<1x512xf32> to vector<16x512xf32>
    %18 = arith.addf %15, %17 : vector<16x512xf32>
    %19 = math.tanh %18 : vector<16x512xf32>
    %c0_12 = arith.constant 0 : index
    %c0_13 = arith.constant 0 : index
    %20 = vector.load %arg6[%c0_12, %c0_13] : memref<1x512xf32, #tpu.memory_space<vmem>>, vector<1x512xf32>
    %21 = vector.broadcast %20 : vector<1x512xf32> to vector<16x512xf32>
    %22 = arith.mulf %19, %21 : vector<16x512xf32>
    %cst_14 = arith.constant dense<0.000000e+00> : vector<16xf32>
    %23 = vector.multi_reduction <add>, %22, %cst_14 [1] : vector<16x512xf32> to vector<16xf32>
    %24 = vector.shape_cast %23 : vector<16xf32> to vector<16x1xf32>
    %c0_15 = arith.constant 0 : index
    %25 = memref.load %arg7[%c0_15] : memref<1xf32, #tpu.memory_space<smem>>
    %26 = vector.broadcast %25 : f32 to vector<16x1xf32>
    %27 = arith.addf %24, %26 : vector<16x1xf32>
    %c0_16 = arith.constant 0 : index
    %c0_17 = arith.constant 0 : index
    %28 = vector.load %arg11[%c0_16, %c0_17] : memref<1x1xf32, #tpu.memory_space<vmem>>, vector<1x1xf32>
    %cst_18 = arith.constant dense<0xFF800000> : vector<1xf32>
    %29 = vector.multi_reduction <maximumf>, %27, %cst_18 [0] : vector<16x1xf32> to vector<1xf32>
    %30 = vector.shape_cast %29 : vector<1xf32> to vector<1x1xf32>
    %31 = arith.maximumf %28, %30 : vector<1x1xf32>
    %32 = arith.subf %28, %31 : vector<1x1xf32>
    %33 = math.exp %32 : vector<1x1xf32>
    %34 = vector.broadcast %31 : vector<1x1xf32> to vector<16x1xf32>
    %35 = arith.subf %27, %34 : vector<16x1xf32>
    %36 = math.exp %35 : vector<16x1xf32>
    %c0_19 = arith.constant 0 : index
    %c0_20 = arith.constant 0 : index
    %37 = vector.load %arg12[%c0_19, %c0_20] : memref<1x1xf32, #tpu.memory_space<vmem>>, vector<1x1xf32>
    %38 = arith.mulf %33, %37 : vector<1x1xf32>
    %cst_21 = arith.constant dense<0.000000e+00> : vector<1xf32>
    %39 = vector.multi_reduction <add>, %36, %cst_21 [0] : vector<16x1xf32> to vector<1xf32>
    %40 = vector.shape_cast %39 : vector<1xf32> to vector<1x1xf32>
    %41 = arith.addf %38, %40 : vector<1x1xf32>
    %c0_22 = arith.constant 0 : index
    %c0_23 = arith.constant 0 : index
    %42 = vector.load %arg12[%c0_22, %c0_23] : memref<1x1xf32, #tpu.memory_space<vmem>>, vector<1x1xf32>
    tpu.vector_store %arg12[%c0_22, %c0_23], %41 {strides = array<i32>} : memref<1x1xf32, #tpu.memory_space<vmem>>, vector<1x1xf32>,
    %c0_24 = arith.constant 0 : index
    %c0_25 = arith.constant 0 : index
    %43 = vector.load %arg13[%c0_24, %c0_25] : memref<1x128xf32, #tpu.memory_space<vmem>>, vector<1x128xf32>
    %44 = vector.broadcast %33 : vector<1x1xf32> to vector<1x128xf32>
    %45 = arith.mulf %44, %43 : vector<1x128xf32>
    %46 = vector.broadcast %36 : vector<16x1xf32> to vector<16x128xf32>
    %47 = arith.mulf %46, %13 : vector<16x128xf32>
    %cst_26 = arith.constant dense<0.000000e+00> : vector<128xf32>
    %48 = vector.multi_reduction <add>, %47, %cst_26 [0] : vector<16x128xf32> to vector<128xf32>
    %49 = vector.shape_cast %48 : vector<128xf32> to vector<1x128xf32>
    %50 = arith.addf %45, %49 : vector<1x128xf32>
    %c0_27 = arith.constant 0 : index
    %c0_28 = arith.constant 0 : index
    %51 = vector.load %arg13[%c0_27, %c0_28] : memref<1x128xf32, #tpu.memory_space<vmem>>, vector<1x128xf32>
    tpu.vector_store %arg13[%c0_27, %c0_28], %50 {strides = array<i32>} : memref<1x128xf32, #tpu.memory_space<vmem>>, vector<1x128xf32>,
    %c0_29 = arith.constant 0 : index
    %c0_30 = arith.constant 0 : index
    %52 = vector.load %arg11[%c0_29, %c0_30] : memref<1x1xf32, #tpu.memory_space<vmem>>, vector<1x1xf32>
    tpu.vector_store %arg11[%c0_29, %c0_30], %31 {strides = array<i32>} : memref<1x1xf32, #tpu.memory_space<vmem>>, vector<1x1xf32>,
    %c1_i32 = arith.constant 1 : i32
    %53 = arith.cmpi eq, %arg1, %c1_i32 : i32
    %54 = arith.extui %53 : i1 to i32
    %c0_i32_31 = arith.constant 0 : i32
    %55 = arith.cmpi ne, %54, %c0_i32_31 : i32
    scf.if %55 {
      %c0_32 = arith.constant 0 : index
      %c0_33 = arith.constant 0 : index
      %56 = vector.load %arg12[%c0_32, %c0_33] : memref<1x1xf32, #tpu.memory_space<vmem>>, vector<1x1xf32>
      %57 = tpu.reciprocal %56 {approx = true} : vector<1x1xf32> -> vector<1x1xf32>
      %c0_34 = arith.constant 0 : index
      %c0_35 = arith.constant 0 : index
      %58 = vector.load %arg13[%c0_34, %c0_35] : memref<1x128xf32, #tpu.memory_space<vmem>>, vector<1x128xf32>
      %59 = vector.broadcast %57 : vector<1x1xf32> to vector<1x128xf32>
      %60 = arith.mulf %58, %59 : vector<1x128xf32>
      %c0_36 = arith.constant 0 : index
      %c0_37 = arith.constant 0 : index
      %61 = vector.load %arg8[%c0_36, %c0_37] : memref<1x128xf32, #tpu.memory_space<vmem>>, vector<1x128xf32>
      %62 = arith.mulf %60, %61 : vector<1x128xf32>
      %cst_38 = arith.constant dense<0.000000e+00> : vector<1xf32>
      %63 = vector.multi_reduction <add>, %62, %cst_38 [1] : vector<1x128xf32> to vector<1xf32>
      %64 = vector.shape_cast %63 : vector<1xf32> to vector<1x1xf32>
      %c0_39 = arith.constant 0 : index
      %65 = memref.load %arg9[%c0_39] : memref<1xf32, #tpu.memory_space<smem>>
      %66 = vector.broadcast %65 : f32 to vector<1x1xf32>
      %67 = arith.addf %64, %66 : vector<1x1xf32>
      %c0_40 = arith.constant 0 : index
      %c0_41 = arith.constant 0 : index
      %c0_42 = arith.constant 0 : index
      %68 = vector.load %arg10[%c0_40, %c0_41, %c0_42] : memref<1x1x1xf32, #tpu.memory_space<vmem>>, vector<1x1x1xf32>
      %69 = vector.shape_cast %68 : vector<1x1x1xf32> to vector<1x1xf32>
      %70 = vector.shape_cast %67 : vector<1x1xf32> to vector<1x1x1xf32>
      tpu.vector_store %arg10[%c0_40, %c0_41, %c0_42], %70 {strides = array<i32>} : memref<1x1x1xf32, #tpu.memory_space<vmem>>, vector<1x1x1xf32>,
    } else {
    }
    return
  }
  func.func @transform_0(%arg0: i32, %arg1: i32) -> (i32, i32, i32) {
    %c0_i32 = arith.constant 0 : i32
    %c0_i32_0 = arith.constant 0 : i32
    return %arg0, %arg1, %c0_i32 : i32, i32, i32
  }
  func.func @transform_1(%arg0: i32, %arg1: i32) -> (i32, i32, i32) {
    %c0_i32 = arith.constant 0 : i32
    %c0_i32_0 = arith.constant 0 : i32
    return %arg0, %arg1, %c0_i32 : i32, i32, i32
  }
  func.func @transform_2(%arg0: i32, %arg1: i32) -> (i32, i32) {
    %c0_i32 = arith.constant 0 : i32
    %c0_i32_0 = arith.constant 0 : i32
    %c0_i32_1 = arith.constant 0 : i32
    return %c0_i32, %c0_i32_0 : i32, i32
  }
  func.func @transform_3(%arg0: i32, %arg1: i32) -> (i32, i32) {
    %c0_i32 = arith.constant 0 : i32
    %c0_i32_0 = arith.constant 0 : i32
    %c0_i32_1 = arith.constant 0 : i32
    return %c0_i32, %c0_i32_0 : i32, i32
  }
  func.func @transform_4(%arg0: i32, %arg1: i32) -> (i32, i32) {
    %c0_i32 = arith.constant 0 : i32
    %c0_i32_0 = arith.constant 0 : i32
    %c0_i32_1 = arith.constant 0 : i32
    return %c0_i32, %c0_i32_0 : i32, i32
  }
  func.func @transform_5(%arg0: i32, %arg1: i32) -> i32 {
    %c0_i32 = arith.constant 0 : i32
    %c0_i32_0 = arith.constant 0 : i32
    return %c0_i32 : i32
  }
  func.func @transform_6(%arg0: i32, %arg1: i32) -> (i32, i32) {
    %c0_i32 = arith.constant 0 : i32
    %c0_i32_0 = arith.constant 0 : i32
    %c0_i32_1 = arith.constant 0 : i32
    return %c0_i32, %c0_i32_0 : i32, i32
  }
  func.func @transform_7(%arg0: i32, %arg1: i32) -> i32 {
    %c0_i32 = arith.constant 0 : i32
    %c0_i32_0 = arith.constant 0 : i32
    return %c0_i32 : i32
  }
  func.func @transform_8(%arg0: i32, %arg1: i32) -> (i32, i32, i32) {
    %c0_i32 = arith.constant 0 : i32
    %c0_i32_0 = arith.constant 0 : i32
    %c0_i32_1 = arith.constant 0 : i32
    return %arg0, %c0_i32, %c0_i32_0 : i32, i32, i32
  }
}

</mosaic_0001>

<llo_original>
// kernel: tpu_custom_call.1
$region0: #{tpu_custom_call.1}
  #allocation0 [shape = 'u32[]', space=smem, size = 0x4, offset = 0x4, fixed_abs, tag = 'smem constant byte address 0x4 - core index']
  #allocation1 [shape = 'u32[144,128]{1,0:T(1,128)}', space=vmem, size = 0x12000, scoped, tag = 'internal scratch']
  #allocation2 [shape = 'f32[1,1]{1,0:T(1,128)}', space=vmem, size = 0x200, scoped, tag = 'scratch operand']
  #allocation3 [shape = 'f32[1,1]{1,0:T(1,128)}', space=vmem, size = 0x200, scoped, tag = 'scratch operand']
  #allocation4 [shape = 'f32[1,128]{1,0:T(1,128)}', space=vmem, size = 0x200, scoped, tag = 'scratch operand']
  #allocation5 [shape = 'f32[1]{0:T(128)S(6)}', space=smem, size = 0x200, scoped, tag = 'scoped memory for tpu_custom_call.1']
  #allocation6 [shape = 'f32[1]{0:T(128)S(6)}', space=smem, size = 0x200, scoped, tag = 'scoped memory for tpu_custom_call.1']
  %s0 = inlined_call_operand.hbm [shape: bf16[2,32,128], index: 0, kind: input, shape index: {}]
  %s1 = inlined_call_operand.hbm [shape: bf16[2,32,128], index: 1, kind: input, shape index: {}]
  %s2 = inlined_call_operand.hbm [shape: f32[128,512], index: 2, kind: input, shape index: {}]
  %s3 = inlined_call_operand.vmem [shape: f32[1,512], index: 3, kind: input, shape index: {}]
  %s4 = inlined_call_operand.vmem [shape: f32[1,512], index: 4, kind: input, shape index: {}]
  %s5 = inlined_call_operand.<no memory space> [shape: f32[1], index: 5, kind: input, shape index: {}]
  %s6 = inlined_call_operand.vmem [shape: f32[1,128], index: 6, kind: input, shape index: {}]
  %s7 = inlined_call_operand.<no memory space> [shape: f32[1], index: 7, kind: input, shape index: {}]
  %s8 = inlined_call_operand.vmem [shape: f32[2,1,1], index: 8, kind: output, shape index: {}]
  %s9 = sld [smem:[#allocation0]]
  $region85: #{tpu_custom_call.1} parent=0
    _
  %s11 = ssub.s32 1, %s9
  %s12 = scalar_select 0, %s11, %s9
  %13 = sst [smem:[#allocation5]] %s5
  %14 = sst [smem:[#allocation6]] %s7
  $region1: #{tpu_custom_call.1} parent=0
    #allocation7 [shape = 'u8[8192]{0}', space=vmem, size = 0x2000, scoped, tag = 'input window, operand 0']
    #allocation8 [shape = 's32[2]{0}', space=sflag, size = 0x8, scoped, tag = 'scoped memory for tpu_custom_call.1']
    #allocation9 [shape = 'u8[8192]{0}', space=vmem, size = 0x2000, scoped, tag = 'input window, operand 1']
    #allocation10 [shape = 's32[2]{0}', space=sflag, size = 0x8, scoped, tag = 'scoped memory for tpu_custom_call.1']
    #allocation11 [shape = 'u8[262144]{0}', space=vmem, size = 0x40000, scoped, tag = 'input window, operand 2, single buffered']
    %15 = vsyncpa [#allocation8], 0
    %s16 = scalar_lea.sflag [#allocation8], 1
    %17 = vsyncpa %s16, 0
    %18 = vsyncpa [#allocation10], 0
    %s19 = scalar_lea.sflag [#allocation10], 1
    %20 = vsyncpa %s19, 0
    loop: start=0, step=1, limit=6
    $region2: #{tpu_custom_call.1} parent=1 // loop_pre_header
      _
    $region3: #{tpu_custom_call.1} parent=1 // loop_header
      %s22 = sphi 0, %s26
      %p23 = scmp.ge.s32.totalorder %s22, 6
      %s29 = sphi 0, %s41
      %s30 = sphi 0, %s37
      %s31 = sphi 0, %s29
      %s32 = sphi 0, %s30
      %s33 = sphi 0, %s31
      %s34 = sphi 0, %s32
      %s46 = sphi 0, %s48
      %s49 = sphi 0, %s46
      %s50 = sphi 0, %s49
      %s66 = sphi 0, %s50
      %s74 = sphi 0, %s76
      %s77 = sphi 0, %s74
      %s78 = sphi 0, %s77
      %s94 = sphi 0, %s78
      %s98 = sphi 0, %s98
      %s100 = sphi 0, %s98
      %s101 = sphi 0, %s100
      %s115 = sphi 0, %s101
      %s119 = sphi 0, %s119
      %s121 = sphi 0, %s119
      %s122 = sphi 0, %s121
      %s136 = sphi 0, %s122
      %s140 = sphi 0, %s140
      %s142 = sphi 0, %s140
      %s143 = sphi 0, %s142
      %s157 = sphi 0, %s143
      %s161 = sphi 0, %s161
      %s163 = sphi 0, %s161
      %s164 = sphi 0, %s163
      %s178 = sphi 0, %s164
      %s182 = sphi 0, %s182
      %s184 = sphi 0, %s182
      %s185 = sphi 0, %s184
      %s199 = sphi 0, %s185
      %s203 = sphi 0, %s203
      %s205 = sphi 0, %s203
      %s206 = sphi 0, %s205
      %s220 = sphi 0, %s206
      %s226 = sphi 0, %s228
      %s229 = sphi 0, %s226
      %s230 = sphi 0, %s229
      %s246 = sphi 0, %s230
    $region4: #{tpu_custom_call.1} parent=1 // loop_header_branch
      %25 = sbr.rel (%p23) target = $region8
    $region5: #{tpu_custom_call.1} parent=1 // loop_body
      %s27 = ssub.s32 %s22, 1
      %s28 = ssub.s32 %s22, 2
      %s35 = sadd.s32 1, %s30
      %p36 = scmp.ge.s32.totalorder %s35, 2
      %s37 = scalar_select %p36, 0, %s35
      %s38 = sadd.s32 1, %s29
      %s39 = scalar_select %p36, %s38, %s29
      %p40 = scmp.ge.s32.totalorder %s39, 2
      %s41 = scalar_select %p40, 0, %s39
      %s42 = ssub.s32 %s29, %s41
      %s43 = ssub.s32 %s30, %s37
      %s44 = sor.u32 %s42, %s43
      %p45 = scmp.eq.s32.totalorder %s44, 0
      %s47 = sadd.s32 %s46, 1
      %s48 = scalar_select %p45, %s46, %s47
      %p51 = pneg %p45
      %p52 = scmp.eq.s32.totalorder %s22, 3
      %p53 = por %p51, %p52
      %p54 = scmp.ne.s32.totalorder %s46, %s49
      %p55 = scmp.eq.s32.totalorder %s22, 0
      %p56 = por %p54, %p55
      %p57 = scmp.ne.s32.totalorder %s46, %s49
      %p58 = scmp.eq.s32.totalorder %s27, 3
      %p59 = por %p57, %p58
      %p60 = scmp.ne.s32.totalorder %s49, %s50
      %p61 = scmp.eq.s32.totalorder %s27, 0
      %p62 = por %p60, %p61
      %p63 = scmp.ne.s32.totalorder %s49, %s50
      %p64 = scmp.eq.s32.totalorder %s28, 3
      %p65 = por %p63, %p64
      %p67 = scmp.ne.s32.totalorder %s50, %s66
      %p68 = scmp.eq.s32.totalorder %s28, 0
      %p69 = por %p67, %p68
      %s70 = ssub.s32 %s29, %s41
      %s71 = ssub.s32 %s30, %s37
      %s72 = sor.u32 %s70, %s71
      %p73 = scmp.eq.s32.totalorder %s72, 0
      %s75 = sadd.s32 %s74, 1
      %s76 = scalar_select %p73, %s74, %s75
      %p79 = pneg %p73
      %p80 = scmp.eq.s32.totalorder %s22, 3
      %p81 = por %p79, %p80
      %p82 = scmp.ne.s32.totalorder %s74, %s77
      %p83 = scmp.eq.s32.totalorder %s22, 0
      %p84 = por %p82, %p83
      %p85 = scmp.ne.s32.totalorder %s74, %s77
      %p86 = scmp.eq.s32.totalorder %s27, 3
      %p87 = por %p85, %p86
      %p88 = scmp.ne.s32.totalorder %s77, %s78
      %p89 = scmp.eq.s32.totalorder %s27, 0
      %p90 = por %p88, %p89
      %p91 = scmp.ne.s32.totalorder %s77, %s78
      %p92 = scmp.eq.s32.totalorder %s28, 3
      %p93 = por %p91, %p92
      %p95 = scmp.ne.s32.totalorder %s78, %s94
      %p96 = scmp.eq.s32.totalorder %s28, 0
      %p97 = por %p95, %p96
      %s99 = sadd.s32 %s98, 1
      %p102 = scmp.eq.s32.totalorder %s22, 3
      %p103 = scmp.ne.s32.totalorder %s98, %s100
      %p104 = scmp.eq.s32.totalorder %s22, 0
      %p105 = por %p103, %p104
      %p106 = scmp.ne.s32.totalorder %s98, %s100
      %p107 = scmp.eq.s32.totalorder %s27, 3
      %p108 = por %p106, %p107
      %p109 = scmp.ne.s32.totalorder %s100, %s101
      %p110 = scmp.eq.s32.totalorder %s27, 0
      %p111 = por %p109, %p110
      %p112 = scmp.ne.s32.totalorder %s100, %s101
      %p113 = scmp.eq.s32.totalorder %s28, 3
      %p114 = por %p112, %p113
      %p116 = scmp.ne.s32.totalorder %s101, %s115
      %p117 = scmp.eq.s32.totalorder %s28, 0
      %p118 = por %p116, %p117
      %s120 = sadd.s32 %s119, 1
      %p123 = scmp.eq.s32.totalorder %s22, 3
      %p124 = scmp.ne.s32.totalorder %s119, %s121
      %p125 = scmp.eq.s32.totalorder %s22, 0
      %p126 = por %p124, %p125
      %p127 = scmp.ne.s32.totalorder %s119, %s121
      %p128 = scmp.eq.s32.totalorder %s27, 3
      %p129 = por %p127, %p128
      %p130 = scmp.ne.s32.totalorder %s121, %s122
      %p131 = scmp.eq.s32.totalorder %s27, 0
      %p132 = por %p130, %p131
      %p133 = scmp.ne.s32.totalorder %s121, %s122
      %p134 = scmp.eq.s32.totalorder %s28, 3
      %p135 = por %p133, %p134
      %p137 = scmp.ne.s32.totalorder %s122, %s136
      %p138 = scmp.eq.s32.totalorder %s28, 0
      %p139 = por %p137, %p138
      %s141 = sadd.s32 %s140, 1
      %p144 = scmp.eq.s32.totalorder %s22, 3
      %p145 = scmp.ne.s32.totalorder %s140, %s142
      %p146 = scmp.eq.s32.totalorder %s22, 0
      %p147 = por %p145, %p146
      %p148 = scmp.ne.s32.totalorder %s140, %s142
      %p149 = scmp.eq.s32.totalorder %s27, 3
      %p150 = por %p148, %p149
      %p151 = scmp.ne.s32.totalorder %s142, %s143
      %p152 = scmp.eq.s32.totalorder %s27, 0
      %p153 = por %p151, %p152
      %p154 = scmp.ne.s32.totalorder %s142, %s143
      %p155 = scmp.eq.s32.totalorder %s28, 3
      %p156 = por %p154, %p155
      %p158 = scmp.ne.s32.totalorder %s143, %s157
      %p159 = scmp.eq.s32.totalorder %s28, 0
      %p160 = por %p158, %p159
      %s162 = sadd.s32 %s161, 1
      %p165 = scmp.eq.s32.totalorder %s22, 3
      %p166 = scmp.ne.s32.totalorder %s161, %s163
      %p167 = scmp.eq.s32.totalorder %s22, 0
      %p168 = por %p166, %p167
      %p169 = scmp.ne.s32.totalorder %s161, %s163
      %p170 = scmp.eq.s32.totalorder %s27, 3
      %p171 = por %p169, %p170
      %p172 = scmp.ne.s32.totalorder %s163, %s164
      %p173 = scmp.eq.s32.totalorder %s27, 0
      %p174 = por %p172, %p173
      %p175 = scmp.ne.s32.totalorder %s163, %s164
      %p176 = scmp.eq.s32.totalorder %s28, 3
      %p177 = por %p175, %p176
      %p179 = scmp.ne.s32.totalorder %s164, %s178
      %p180 = scmp.eq.s32.totalorder %s28, 0
      %p181 = por %p179, %p180
      %s183 = sadd.s32 %s182, 1
      %p186 = scmp.eq.s32.totalorder %s22, 3
      %p187 = scmp.ne.s32.totalorder %s182, %s184
      %p188 = scmp.eq.s32.totalorder %s22, 0
      %p189 = por %p187, %p188
      %p190 = scmp.ne.s32.totalorder %s182, %s184
      %p191 = scmp.eq.s32.totalorder %s27, 3
      %p192 = por %p190, %p191
      %p193 = scmp.ne.s32.totalorder %s184, %s185
      %p194 = scmp.eq.s32.totalorder %s27, 0
      %p195 = por %p193, %p194
      %p196 = scmp.ne.s32.totalorder %s184, %s185
      %p197 = scmp.eq.s32.totalorder %s28, 3
      %p198 = por %p196, %p197
      %p200 = scmp.ne.s32.totalorder %s185, %s199
      %p201 = scmp.eq.s32.totalorder %s28, 0
      %p202 = por %p200, %p201
      %s204 = sadd.s32 %s203, 1
      %p207 = scmp.eq.s32.totalorder %s22, 3
      %p208 = scmp.ne.s32.totalorder %s203, %s205
      %p209 = scmp.eq.s32.totalorder %s22, 0
      %p210 = por %p208, %p209
      %p211 = scmp.ne.s32.totalorder %s203, %s205
      %p212 = scmp.eq.s32.totalorder %s27, 3
      %p213 = por %p211, %p212
      %p214 = scmp.ne.s32.totalorder %s205, %s206
      %p215 = scmp.eq.s32.totalorder %s27, 0
      %p216 = por %p214, %p215
      %p217 = scmp.ne.s32.totalorder %s205, %s206
      %p218 = scmp.eq.s32.totalorder %s28, 3
      %p219 = por %p217, %p218
      %p221 = scmp.ne.s32.totalorder %s206, %s220
      %p222 = scmp.eq.s32.totalorder %s28, 0
      %p223 = por %p221, %p222
      %s224 = ssub.s32 %s29, %s41
      %p225 = scmp.eq.s32.totalorder %s224, 0
      %s227 = sadd.s32 %s226, 1
      %s228 = scalar_select %p225, %s226, %s227
      %p231 = pneg %p225
      %p232 = scmp.eq.s32.totalorder %s22, 3
      %p233 = por %p231, %p232
      %p234 = scmp.ne.s32.totalorder %s226, %s229
      %p235 = scmp.eq.s32.totalorder %s22, 0
      %p236 = por %p234, %p235
      %p237 = scmp.ne.s32.totalorder %s226, %s229
      %p238 = scmp.eq.s32.totalorder %s27, 3
      %p239 = por %p237, %p238
      %p240 = scmp.ne.s32.totalorder %s229, %s230
      %p241 = scmp.eq.s32.totalorder %s27, 0
      %p242 = por %p240, %p241
      %p243 = scmp.ne.s32.totalorder %s229, %s230
      %p244 = scmp.eq.s32.totalorder %s28, 3
      %p245 = por %p243, %p244
      %p247 = scmp.ne.s32.totalorder %s230, %s246
      %p248 = scmp.eq.s32.totalorder %s28, 0
      %p249 = por %p247, %p248
      %p250 = scmp.le.s32.totalorder 1, %s22
      %p251 = scmp.lt.s32.totalorder %s22, 5
      %p252 = pnand %p250, %p251
      %p253 = pneg %p252
      // Predicated region
      $region9: #{tpu_custom_call.1} parent=5 // pred_check
        _
      $region10: #{tpu_custom_call.1} parent=5 // pred_check_branch
        %255 = sbr.rel (%p252) target = $region12
      $region11: #{tpu_custom_call.1} parent=5 // pred_region
        %s256 = ssub.s32 %s22, 1
        // Predicated region
        $region13: #{tpu_custom_call.1} parent=11 // pred_check
          %p257 = pneg %p111
        $region14: #{tpu_custom_call.1} parent=11 // pred_check_branch
          %259 = sbr.rel (%p257) target = $region16
        $region15: #{tpu_custom_call.1} parent=11 // pred_region
          %s261 = ssub.s32 8192, 8192
          %262 = vsyncadd [#allocation10], %s261
          %s263 = sshll.u32 [#allocation11], 4
          %s264 = int_to_ptr.vmem [resolvable:$true] %s263
          %269 = dma.hbm_to_vmem [thread:$0]  %s2, 8192, %s264, [#allocation10], 512, 512, 32
        $region16: #{tpu_custom_call.1} parent=11 // pred_fallthru
          _
        // Predicated region
        $region17: #{tpu_custom_call.1} parent=11 // pred_check
          %p270 = pneg %p132
        $region18: #{tpu_custom_call.1} parent=11 // pred_check_branch
          %272 = sbr.rel (%p270) target = $region20
        $region19: #{tpu_custom_call.1} parent=11 // pred_region
          _
        $region20: #{tpu_custom_call.1} parent=11 // pred_fallthru
          _
        // Predicated region
        $region21: #{tpu_custom_call.1} parent=11 // pred_check
          %p273 = pneg %p153
        $region22: #{tpu_custom_call.1} parent=11 // pred_check_branch
          %275 = sbr.rel (%p273) target = $region24
        $region23: #{tpu_custom_call.1} parent=11 // pred_region
          _
        $region24: #{tpu_custom_call.1} parent=11 // pred_fallthru
          _
        // Predicated region
        $region25: #{tpu_custom_call.1} parent=11 // pred_check
          %p276 = pneg %p174
        $region26: #{tpu_custom_call.1} parent=11 // pred_check_branch
          %278 = sbr.rel (%p276) target = $region28
        $region27: #{tpu_custom_call.1} parent=11 // pred_region
          _
        $region28: #{tpu_custom_call.1} parent=11 // pred_fallthru
          _
        // Predicated region
        $region29: #{tpu_custom_call.1} parent=11 // pred_check
          %p279 = pneg %p195
        $region30: #{tpu_custom_call.1} parent=11 // pred_check_branch
          %281 = sbr.rel (%p279) target = $region32
        $region31: #{tpu_custom_call.1} parent=11 // pred_region
          _
        $region32: #{tpu_custom_call.1} parent=11 // pred_fallthru
          _
        // Predicated region
        $region33: #{tpu_custom_call.1} parent=11 // pred_check
          %p282 = pneg %p216
        $region34: #{tpu_custom_call.1} parent=11 // pred_check_branch
          %284 = sbr.rel (%p282) target = $region36
        $region35: #{tpu_custom_call.1} parent=11 // pred_region
          _
        $region36: #{tpu_custom_call.1} parent=11 // pred_fallthru
          _
      $region12: #{tpu_custom_call.1} parent=5 // pred_fallthru
        _
      %p285 = scmp.lt.s32.totalorder %s22, 4
      // Predicated region
      $region37: #{tpu_custom_call.1} parent=5 // pred_check
        %p286 = pneg %p285
      $region38: #{tpu_custom_call.1} parent=5 // pred_check_branch
        %288 = sbr.rel (%p286) target = $region40
      $region39: #{tpu_custom_call.1} parent=5 // pred_region
        // Predicated region
        $region41: #{tpu_custom_call.1} parent=39 // pred_check
          %p289 = pneg %p56
        $region42: #{tpu_custom_call.1} parent=39 // pred_check_branch
          %291 = sbr.rel (%p289) target = $region44
        $region43: #{tpu_custom_call.1} parent=39 // pred_region
          %s292 = sand.u32 %s46, 1
          %s293 = scalar_lea.sflag [#allocation8], %s292
          %s294 = sand.u32 %s46, 1
          %s295 = smul.addr %s294, 8
          %s296 = scalar_lea.vmem [#allocation7], %s295
          %s297 = smul.u32 2, %s30
          %s299 = ssub.s32 128, 128
          %300 = vsyncadd %s293, %s299
          %s301 = smul.addr %s29, 4
          %s302 = sadd.s32 %s297, %s301
          %s303 = smul.addr %s302, 64
          %s304 = scalar_lea.hbm %s0, %s303
          %s305 = sshll.u32 %s296, 4
          %s306 = int_to_ptr.vmem [resolvable:$true] %s305
          %311 = dma.hbm_to_vmem [thread:$0]  %s304, 128, %s306, %s293, 64, 64, 4
        $region44: #{tpu_custom_call.1} parent=39 // pred_fallthru
          _
        // Predicated region
        $region45: #{tpu_custom_call.1} parent=39 // pred_check
          %p312 = pneg %p84
        $region46: #{tpu_custom_call.1} parent=39 // pred_check_branch
          %314 = sbr.rel (%p312) target = $region48
        $region47: #{tpu_custom_call.1} parent=39 // pred_region
          %s315 = sand.u32 %s22, 1
          %s316 = scalar_lea.sflag [#allocation10], %s315
          %s317 = sand.u32 %s74, 1
          %s318 = smul.addr %s317, 8
          %s319 = scalar_lea.vmem [#allocation9], %s318
          %s320 = smul.u32 2, %s30
          %s322 = ssub.s32 128, 128
          %323 = vsyncadd %s316, %s322
          %s324 = smul.addr %s29, 4
          %s325 = sadd.s32 %s320, %s324
          %s326 = smul.addr %s325, 64
          %s327 = scalar_lea.hbm %s1, %s326
          %s328 = sshll.u32 %s319, 4
          %s329 = int_to_ptr.vmem [resolvable:$true] %s328
          %334 = dma.hbm_to_vmem [thread:$0]  %s327, 128, %s329, %s316, 64, 64, 4
        $region48: #{tpu_custom_call.1} parent=39 // pred_fallthru
          _
      $region40: #{tpu_custom_call.1} parent=5 // pred_fallthru
        _
      %p335 = scmp.le.s32.totalorder 1, %s22
      %p336 = scmp.lt.s32.totalorder %s22, 5
      %p337 = pnand %p335, %p336
      %p338 = pneg %p337
      // Predicated region
      $region49: #{tpu_custom_call.1} parent=5 // pred_check
        _
      $region50: #{tpu_custom_call.1} parent=5 // pred_check_branch
        %340 = sbr.rel (%p337) target = $region52
      $region51: #{tpu_custom_call.1} parent=5 // pred_region
        %s341 = ssub.s32 %s22, 1
        %s342 = sand.u32 %s49, 1
        %s343 = scalar_lea.sflag [#allocation8], %s342
        %s344 = sand.u32 %s49, 1
        %s345 = smul.addr %s344, 8
        %s346 = scalar_lea.vmem [#allocation7], %s345
        // Predicated region
        $region53: #{tpu_custom_call.1} parent=51 // pred_check
          %p347 = pneg %p62
        $region54: #{tpu_custom_call.1} parent=51 // pred_check_branch
          %349 = sbr.rel (%p347) target = $region56
        $region55: #{tpu_custom_call.1} parent=51 // pred_region
          %350 = dma.done %s343, 128
        $region56: #{tpu_custom_call.1} parent=51 // pred_fallthru
          _
        %s351 = sand.u32 %s27, 1
        %s352 = scalar_lea.sflag [#allocation10], %s351
        %s353 = sand.u32 %s77, 1
        %s354 = smul.addr %s353, 8
        %s355 = scalar_lea.vmem [#allocation9], %s354
        // Predicated region
        $region57: #{tpu_custom_call.1} parent=51 // pred_check
          %p356 = pneg %p90
        $region58: #{tpu_custom_call.1} parent=51 // pred_check_branch
          %358 = sbr.rel (%p356) target = $region60
        $region59: #{tpu_custom_call.1} parent=51 // pred_region
          %359 = dma.done %s352, 128
        $region60: #{tpu_custom_call.1} parent=51 // pred_fallthru
          _
        // Predicated region
        $region61: #{tpu_custom_call.1} parent=51 // pred_check
          %p360 = pneg %p111
        $region62: #{tpu_custom_call.1} parent=51 // pred_check_branch
          %362 = sbr.rel (%p360) target = $region64
        $region63: #{tpu_custom_call.1} parent=51 // pred_region
          %363 = dma.done [#allocation10], 8192
        $region64: #{tpu_custom_call.1} parent=51 // pred_fallthru
          _
        %s364 = sand.u32 %s49, 1
        %s365 = scalar_lea.sflag [#allocation8], %s364
        %s366 = sand.u32 %s49, 1
        %s367 = smul.addr %s366, 8
        %s368 = scalar_lea.vmem [#allocation7], %s367
        %p369 = pneg %p62
        %p370 = pneg %p59
        %s371 = sand.u32 %s27, 1
        %s372 = scalar_lea.sflag [#allocation10], %s371
        %s373 = sand.u32 %s77, 1
        %s374 = smul.addr %s373, 8
        %s375 = scalar_lea.vmem [#allocation9], %s374
        %p376 = pneg %p90
        %p377 = pneg %p87
        %p378 = pneg %p111
        %p379 = pneg %p108
        %p380 = pneg %p132
        %p381 = pneg %p129
        %p382 = pneg %p153
        %p383 = pneg %p150
        %p384 = pneg %p174
        %p385 = pneg %p171
        %p386 = pneg %p195
        %p387 = pneg %p192
        %p388 = pneg %p216
        %p389 = pneg %p213
        %p390 = pneg %p242
        %p391 = pneg %p239
        %p392 = scmp.lt.s32.totalorder %s31, 1
        %s393 = scalar_select %p392, %s31, 1
        %s394 = scalar_lea.vmem %s8, %s393
        %s395 = smul.u32 2, %s32
        %s396 = smul.u32 2, %s32
        %p397 = scmp.lt.s32.totalorder %s31, 1
        %s398 = scalar_select %p397, %s31, 1
        %s399 = scalar_lea.vmem %s8, %s398
        %p400 = scmp.eq.s32.totalorder %s32, 0
        // Predicated region
        $region65: #{tpu_custom_call.1} parent=51 // pred_check
          %p401 = pneg %p400
        $region66: #{tpu_custom_call.1} parent=51 // pred_check_branch
          %403 = sbr.rel (%p401) target = $region68
        $region67: #{tpu_custom_call.1} parent=51 // pred_region
          %vm404 = vcmask 0
          %405 = vst.msk [vmem:[#allocation2] sm:$0x1] %vm404, -inf
          %406 = vst.msk [vmem:[#allocation3] sm:$0x1] %vm404, 0.0
          %407 = vst [vmem:[#allocation4] sm:$0x1] 0.0
        $region68: #{tpu_custom_call.1} parent=51 // pred_fallthru
          _
        %v408 = vld [vmem:[%s346] sm:$0xf]
        %v409 = vld [vmem:[%s346 + $0x4] sm:$0xf]
        %v410 = vunpack.c.l.bf16 %v408
        %v411 = vunpack.c.l.bf16 %v409
        %v412 = vmul.f32 %v410, 0.6666667
        %v413 = vmul.f32 %v411, 0.6666667
        %v414 = vld [vmem:[%s355] sm:$0xf]
        %v415 = vld [vmem:[%s355 + $0x4] sm:$0xf]
        %v416 = vunpack.c.l.bf16 %v414
        %v417 = vunpack.c.l.bf16 %v415
        %v418 = vmul.f32 %v416, 0.33333334
        %v419 = vmul.f32 %v417, 0.33333334
        %v420 = vadd.f32 %v412, %v418
        %v421 = vadd.f32 %v413, %v419
        %v422 = vld [vmem:[#allocation11] sm:$0xff]
        %v423 = vld [vmem:[#allocation11 + $0x8] sm:$0xff]
        %v424 = vld [vmem:[#allocation11 + $0x10] sm:$0xff]
        %v425 = vld [vmem:[#allocation11 + $0x18] sm:$0xff]
        %v426 = vld [vmem:[#allocation11 + $0x20] sm:$0xff]
        %v427 = vld [vmem:[#allocation11 + $0x28] sm:$0xff]
        %v428 = vld [vmem:[#allocation11 + $0x30] sm:$0xff]
        %v429 = vld [vmem:[#allocation11 + $0x38] sm:$0xff]
        %v430 = vld [vmem:[#allocation11 + $0x40] sm:$0xff]
        %v431 = vld [vmem:[#allocation11 + $0x48] sm:$0xff]
        %v432 = vld [vmem:[#allocation11 + $0x50] sm:$0xff]
        %v433 = vld [vmem:[#allocation11 + $0x58] sm:$0xff]
        %v434 = vld [vmem:[#allocation11 + $0x60] sm:$0xff]
        %v435 = vld [vmem:[#allocation11 + $0x68] sm:$0xff]
        %v436 = vld [vmem:[#allocation11 + $0x70] sm:$0xff]
        %v437 = vld [vmem:[#allocation11 + $0x78] sm:$0xff]
        %v438 = vld [vmem:[#allocation11 + $0x80] sm:$0xff]
        %v439 = vld [vmem:[#allocation11 + $0x88] sm:$0xff]
        %v440 = vld [vmem:[#allocation11 + $0x90] sm:$0xff]
        %v441 = vld [vmem:[#allocation11 + $0x98] sm:$0xff]
        %v442 = vld [vmem:[#allocation11 + $0xa0] sm:$0xff]
        %v443 = vld [vmem:[#allocation11 + $0xa8] sm:$0xff]
        %v444 = vld [vmem:[#allocation11 + $0xb0] sm:$0xff]
        %v445 = vld [vmem:[#allocation11 + $0xb8] sm:$0xff]
        %v446 = vld [vmem:[#allocation11 + $0xc0] sm:$0xff]
        %v447 = vld [vmem:[#allocation11 + $0xc8] sm:$0xff]
        %v448 = vld [vmem:[#allocation11 + $0xd0] sm:$0xff]
        %v449 = vld [vmem:[#allocation11 + $0xd8] sm:$0xff]
        %v450 = vld [vmem:[#allocation11 + $0xe0] sm:$0xff]
        %v451 = vld [vmem:[#allocation11 + $0xe8] sm:$0xff]
        %v452 = vld [vmem:[#allocation11 + $0xf0] sm:$0xff]
        %v453 = vld [vmem:[#allocation11 + $0xf8] sm:$0xff]
        %v454 = vld [vmem:[#allocation11 + $0x100] sm:$0xff]
        %v455 = vld [vmem:[#allocation11 + $0x108] sm:$0xff]
        %v456 = vld [vmem:[#allocation11 + $0x110] sm:$0xff]
        %v457 = vld [vmem:[#allocation11 + $0x118] sm:$0xff]
        %v458 = vld [vmem:[#allocation11 + $0x120] sm:$0xff]
        %v459 = vld [vmem:[#allocation11 + $0x128] sm:$0xff]
        %v460 = vld [vmem:[#allocation11 + $0x130] sm:$0xff]
        %v461 = vld [vmem:[#allocation11 + $0x138] sm:$0xff]
        %v462 = vld [vmem:[#allocation11 + $0x140] sm:$0xff]
        %v463 = vld [vmem:[#allocation11 + $0x148] sm:$0xff]
        %v464 = vld [vmem:[#allocation11 + $0x150] sm:$0xff]
        %v465 = vld [vmem:[#allocation11 + $0x158] sm:$0xff]
        %v466 = vld [vmem:[#allocation11 + $0x160] sm:$0xff]
        %v467 = vld [vmem:[#allocation11 + $0x168] sm:$0xff]
        %v468 = vld [vmem:[#allocation11 + $0x170] sm:$0xff]
        %v469 = vld [vmem:[#allocation11 + $0x178] sm:$0xff]
        %v470 = vld [vmem:[#allocation11 + $0x180] sm:$0xff]
        %v471 = vld [vmem:[#allocation11 + $0x188] sm:$0xff]
        %v472 = vld [vmem:[#allocation11 + $0x190] sm:$0xff]
        %v473 = vld [vmem:[#allocation11 + $0x198] sm:$0xff]
        %v474 = vld [vmem:[#allocation11 + $0x1a0] sm:$0xff]
        %v475 = vld [vmem:[#allocation11 + $0x1a8] sm:$0xff]
        %v476 = vld [vmem:[#allocation11 + $0x1b0] sm:$0xff]
        %v477 = vld [vmem:[#allocation11 + $0x1b8] sm:$0xff]
        %v478 = vld [vmem:[#allocation11 + $0x1c0] sm:$0xff]
        %v479 = vld [vmem:[#allocation11 + $0x1c8] sm:$0xff]
        %v480 = vld [vmem:[#allocation11 + $0x1d0] sm:$0xff]
        %v481 = vld [vmem:[#allocation11 + $0x1d8] sm:$0xff]
        %v482 = vld [vmem:[#allocation11 + $0x1e0] sm:$0xff]
        %v483 = vld [vmem:[#allocation11 + $0x1e8] sm:$0xff]
        %v484 = vld [vmem:[#allocation11 + $0x1f0] sm:$0xff]
        %v485 = vld [vmem:[#allocation11 + $0x1f8] sm:$0xff]
        %v486 = vld [vmem:[%s3] sm:$0xf]
        %v488 = vlaneseq
        %v489 = vshrl.u32 %v488, 7
        %v490 = vsub.s32 0, %v489
        %v491 = vrot.slane %v486, %v490
        %v492 = vlaneseq
        %v493 = vshrl.u32 %v492, 7
        %v494 = vsub.s32 1, %v493
        %v495 = vrot.slane %v486, %v494
        %v496 = vlaneseq
        %v497 = vshrl.u32 %v496, 7
        %v498 = vsub.s32 2, %v497
        %v499 = vrot.slane %v486, %v498
        %v500 = vlaneseq
        %v501 = vshrl.u32 %v500, 7
        %v502 = vsub.s32 3, %v501
        %v503 = vrot.slane %v486, %v502
        %508 = vmatprep.subr.mxu0 %v423
        %509 = vmatpush1.msra.mxu0 %v422
        %510 = vmatprep.subr.mxu0 %v427
        %511 = vmatpush1.msra.mxu0 %v426
        %512 = vmatprep.subr.mxu0 %v431
        %513 = vmatpush1.msra.mxu0 %v430
        %514 = vmatprep.subr.mxu0 %v435
        %515 = vmatpush1.msra.mxu0 %v434
        %516 = vmatprep.subr.mxu0 %v439
        %517 = vmatpush1.msra.mxu0 %v438
        %518 = vmatprep.subr.mxu0 %v443
        %519 = vmatpush1.msra.mxu0 %v442
        %520 = vmatprep.subr.mxu0 %v447
        %521 = vmatpush1.msra.mxu0 %v446
        %522 = vmatprep.subr.mxu0 %v451
        %523 = vmatpush1.msra.mxu0 %v450
        %524 = vmatprep.subr.mxu0 %v455
        %525 = vmatpush1.msra.mxu0 %v454
        %526 = vmatprep.subr.mxu0 %v459
        %527 = vmatpush1.msra.mxu0 %v458
        %528 = vmatprep.subr.mxu0 %v463
        %529 = vmatpush1.msra.mxu0 %v462
        %530 = vmatprep.subr.mxu0 %v467
        %531 = vmatpush1.msra.mxu0 %v466
        %532 = vmatprep.subr.mxu0 %v471
        %533 = vmatpush1.msra.mxu0 %v470
        %534 = vmatprep.subr.mxu0 %v475
        %535 = vmatpush1.msra.mxu0 %v474
        %536 = vmatprep.subr.mxu0 %v479
        %537 = vmatpush1.msra.mxu0 %v478
        %538 = vmatprep.subr.mxu0 %v483
        %539 = vmatpush1.msra.mxu0 %v482
        %540 = vmatprep.subr.mxu0 0.0
        %541 = vmatpush1.msra.mxu0 0.0
        %542 = vmatprep.subr.mxu0 0.0
        %543 = vmatpush1.msra.mxu0 0.0
        %544 = vmatprep.subr.mxu0 0.0
        %545 = vmatpush1.msra.mxu0 0.0
        %546 = vmatprep.subr.mxu0 0.0
        %547 = vmatpush1.msra.mxu0 0.0
        %548 = vmatprep.subr.mxu0 0.0
        %549 = vmatpush1.msra.mxu0 0.0
        %550 = vmatprep.subr.mxu0 0.0
        %551 = vmatpush1.msra.mxu0 0.0
        %552 = vmatprep.subr.mxu0 0.0
        %553 = vmatpush1.msra.mxu0 0.0
        %554 = vmatprep.subr.mxu0 0.0
        %555 = vmatpush1.msra.mxu0 0.0
        %556 = vmatprep.subr.mxu0 0.0
        %557 = vmatpush1.msra.mxu0 0.0
        %558 = vmatprep.subr.mxu0 0.0
        %559 = vmatpush1.msra.mxu0 0.0
        %560 = vmatprep.subr.mxu0 0.0
        %561 = vmatpush1.msra.mxu0 0.0
        %562 = vmatprep.subr.mxu0 0.0
        %563 = vmatpush1.msra.mxu0 0.0
        %564 = vmatprep.subr.mxu0 0.0
        %565 = vmatpush1.msra.mxu0 0.0
        %566 = vmatprep.subr.mxu0 0.0
        %567 = vmatpush1.msra.mxu0 0.0
        %568 = vmatprep.subr.mxu0 0.0
        %569 = vmatpush1.msra.mxu0 0.0
        %570 = vmatprep.subr.mxu0 0.0
        %571 = vmatpush1.msra.mxu0 0.0
        %572 = vmatprep.mubr.f32.mxu0 0.0
        %573 = vmatmul.mubr.f32.gmra.mrb[0].mxu0 %v420
        %v574 = vpop.f32.mrb[0].mxu0
        %v575 = vadd.f32 %v491, %v574
        %v576 = vpop.f32.mrb[0].mxu0
        %v577 = vadd.f32 %v495, %v576
        %578 = vmatprep.mubr.f32.mxu0 0.0
        %579 = vmatmul.mubr.f32.gmra.mrb[0].mxu0 %v421
        %v580 = vpop.f32.mrb[0].mxu0
        %v581 = vadd.f32 %v491, %v580
        %v582 = vpop.f32.mrb[0].mxu0
        %v583 = vadd.f32 %v495, %v582
        %584 = vdwg.mxu0
        %585 = vmatprep.subr.mxu0 %v425
        %586 = vmatpush1.msra.mxu0 %v424
        %587 = vmatprep.subr.mxu0 %v429
        %588 = vmatpush1.msra.mxu0 %v428
        %589 = vmatprep.subr.mxu0 %v433
        %590 = vmatpush1.msra.mxu0 %v432
        %591 = vmatprep.subr.mxu0 %v437
        %592 = vmatpush1.msra.mxu0 %v436
        %593 = vmatprep.subr.mxu0 %v441
        %594 = vmatpush1.msra.mxu0 %v440
        %595 = vmatprep.subr.mxu0 %v445
        %596 = vmatpush1.msra.mxu0 %v444
        %597 = vmatprep.subr.mxu0 %v449
        %598 = vmatpush1.msra.mxu0 %v448
        %599 = vmatprep.subr.mxu0 %v453
        %600 = vmatpush1.msra.mxu0 %v452
        %601 = vmatprep.subr.mxu0 %v457
        %602 = vmatpush1.msra.mxu0 %v456
        %603 = vmatprep.subr.mxu0 %v461
        %604 = vmatpush1.msra.mxu0 %v460
        %605 = vmatprep.subr.mxu0 %v465
        %606 = vmatpush1.msra.mxu0 %v464
        %607 = vmatprep.subr.mxu0 %v469
        %608 = vmatpush1.msra.mxu0 %v468
        %609 = vmatprep.subr.mxu0 %v473
        %610 = vmatpush1.msra.mxu0 %v472
        %611 = vmatprep.subr.mxu0 %v477
        %612 = vmatpush1.msra.mxu0 %v476
        %613 = vmatprep.subr.mxu0 %v481
        %614 = vmatpush1.msra.mxu0 %v480
        %615 = vmatprep.subr.mxu0 %v485
        %616 = vmatpush1.msra.mxu0 %v484
        %617 = vmatprep.subr.mxu0 0.0
        %618 = vmatpush1.msra.mxu0 0.0
        %619 = vmatprep.subr.mxu0 0.0
        %620 = vmatpush1.msra.mxu0 0.0
        %621 = vmatprep.subr.mxu0 0.0
        %622 = vmatpush1.msra.mxu0 0.0
        %623 = vmatprep.subr.mxu0 0.0
        %624 = vmatpush1.msra.mxu0 0.0
        %625 = vmatprep.subr.mxu0 0.0
        %626 = vmatpush1.msra.mxu0 0.0
        %627 = vmatprep.subr.mxu0 0.0
        %628 = vmatpush1.msra.mxu0 0.0
        %629 = vmatprep.subr.mxu0 0.0
        %630 = vmatpush1.msra.mxu0 0.0
        %631 = vmatprep.subr.mxu0 0.0
        %632 = vmatpush1.msra.mxu0 0.0
        %633 = vmatprep.subr.mxu0 0.0
        %634 = vmatpush1.msra.mxu0 0.0
        %635 = vmatprep.subr.mxu0 0.0
        %636 = vmatpush1.msra.mxu0 0.0
        %637 = vmatprep.subr.mxu0 0.0
        %638 = vmatpush1.msra.mxu0 0.0
        %639 = vmatprep.subr.mxu0 0.0
        %640 = vmatpush1.msra.mxu0 0.0
        %641 = vmatprep.subr.mxu0 0.0
        %642 = vmatpush1.msra.mxu0 0.0
        %643 = vmatprep.subr.mxu0 0.0
        %644 = vmatpush1.msra.mxu0 0.0
        %645 = vmatprep.subr.mxu0 0.0
        %646 = vmatpush1.msra.mxu0 0.0
        %647 = vmatprep.subr.mxu0 0.0
        %648 = vmatpush1.msra.mxu0 0.0
        %649 = vmatprep.mubr.f32.mxu0 0.0
        %650 = vmatmul.mubr.f32.gmra.mrb[0].mxu0 %v420
        %v651 = vpop.f32.mrb[0].mxu0
        %v652 = vadd.f32 %v499, %v651
        %v653 = vpop.f32.mrb[0].mxu0
        %v654 = vadd.f32 %v503, %v653
        %655 = vmatprep.mubr.f32.mxu0 0.0
        %656 = vmatmul.mubr.f32.gmra.mrb[0].mxu0 %v421
        %v657 = vpop.f32.mrb[0].mxu0
        %v658 = vadd.f32 %v499, %v657
        %v659 = vpop.f32.mrb[0].mxu0
        %v660 = vadd.f32 %v503, %v659
        %661 = vdwg.mxu0
        %v662 = vtanh.pop %v575
        %v663 = vtanh.pop %v577
        %v664 = vtanh.pop %v652
        %v665 = vtanh.pop %v654
        %v666 = vtanh.pop %v581
        %v667 = vtanh.pop %v583
        %v668 = vtanh.pop %v658
        %v669 = vtanh.pop %v660
        %v670 = vld [vmem:[%s4] sm:$0xf]
        %v672 = vlaneseq
        %v673 = vshrl.u32 %v672, 7
        %v674 = vsub.s32 0, %v673
        %v675 = vrot.slane %v670, %v674
        %v676 = vlaneseq
        %v677 = vshrl.u32 %v676, 7
        %v678 = vsub.s32 1, %v677
        %v679 = vrot.slane %v670, %v678
        %v680 = vlaneseq
        %v681 = vshrl.u32 %v680, 7
        %v682 = vsub.s32 2, %v681
        %v683 = vrot.slane %v670, %v682
        %v684 = vlaneseq
        %v685 = vshrl.u32 %v684, 7
        %v686 = vsub.s32 3, %v685
        %v687 = vrot.slane %v670, %v686
        %v692 = vmul.f32 %v662, %v675
        %v693 = vmul.f32 %v663, %v679
        %v694 = vmul.f32 %v664, %v683
        %v695 = vmul.f32 %v665, %v687
        %v696 = vmul.f32 %v666, %v675
        %v697 = vmul.f32 %v667, %v679
        %v698 = vmul.f32 %v668, %v683
        %v699 = vmul.f32 %v669, %v687
        %v700 = vadd.f32 %v692, %v693
        %v701 = vadd.f32 %v700, %v694
        %v702 = vadd.f32 %v701, %v695
        %703 = vadd.xlane.f32.xlu0 %v702
        %v704 = vpop.xlane.xlu0 %703
        %v705 = vadd.f32 %v696, %v697
        %v706 = vadd.f32 %v705, %v698
        %v707 = vadd.f32 %v706, %v699
        %708 = vadd.xlane.f32.xlu0 %v707
        %v709 = vpop.xlane.xlu0 %708
        %s710 = sld [smem:[#allocation5]]
        %v711 = vstv %s710
        %v712 = vadd.f32 %v704, %v711
        %v713 = vadd.f32 %v709, %v711
        %v714 = vld [vmem:[#allocation2] sm:$0x1]
        %v715 = vmax.f32 %v712, %v713
        %v716 = vrot.slane %v715, 4
        %v717 = vmax.f32 %v715, %v716
        %v718 = vrot.slane %v717, 2
        %v719 = vmax.f32 %v717, %v718
        %v720 = vrot.slane %v719, 1
        %v721 = vmax.f32 %v719, %v720
        %v722 = vmax.f32 %v714, %v721
        %v723 = vsub.f32 %v714, %v722
        %v724 = vmul.f32 %v723, 1.442695
        %v725 = vpow.pop %v724
        %v727 = vlaneseq
        %v728 = vshrl.u32 %v727, 7
        %v729 = vsub.s32 0, %v728
        %v730 = vrot.slane %v722, %v729
        %v732 = vsub.f32 %v712, %v730
        %v733 = vsub.f32 %v713, %v730
        %v734 = vmul.f32 %v732, 1.442695
        %v735 = vpow.pop %v734
        %v736 = vmul.f32 %v733, 1.442695
        %v737 = vpow.pop %v736
        %v738 = vld [vmem:[#allocation3] sm:$0x1]
        %v739 = vmul.f32 %v725, %v738
        %vm740 = vcmask 7168
        %v741 = vsel %vm740, %v735, 0.0
        %v742 = vsel %vm740, %v737, 0.0
        %v743 = vadd.f32 %v741, %v742
        %v744 = vrot.slane %v743, 4
        %v745 = vadd.f32 %v743, %v744
        %v746 = vrot.slane %v745, 2
        %v747 = vadd.f32 %v745, %v746
        %v748 = vrot.slane %v747, 1
        %v749 = vadd.f32 %v747, %v748
        %v750 = vadd.f32 %v739, %v749
        %vm751 = vcmask 0
        %752 = vst.msk [vmem:[#allocation3] sm:$0x1] %vm751, %v750
        %v753 = vld [vmem:[#allocation4] sm:$0x1]
        %755 = vset.pattern.permute.xlu0 0
        %756 = vperm.xlu0 %755, %v725
        %v757 = vpop.permute.xlu0 %756
        %v759 = vlaneseq
        %v760 = vshrl.u32 %v759, 7
        %v761 = vsub.s32 0, %v760
        %v762 = vrot.slane %v757, %v761
        %v763 = vmul.f32 %v762, %v753
        %765 = vset.pattern.permute.xlu0 0
        %766 = vperm.xlu0 %765, %v735
        %v767 = vpop.permute.xlu0 %766
        %770 = vset.pattern.permute.xlu0 0
        %771 = vperm.xlu0 %770, %v737
        %v772 = vpop.permute.xlu0 %771
        %v774 = vmul.f32 %v767, %v420
        %v775 = vmul.f32 %v772, %v421
        %v776 = vadd.f32 %v774, %v775
        %v777 = vrot.slane %v776, 4
        %v778 = vadd.f32 %v776, %v777
        %v779 = vrot.slane %v778, 2
        %v780 = vadd.f32 %v778, %v779
        %v781 = vrot.slane %v780, 1
        %v782 = vadd.f32 %v780, %v781
        %v783 = vadd.f32 %v763, %v782
        %784 = vst [vmem:[#allocation4] sm:$0x1] %v783
        %785 = vst.msk [vmem:[#allocation2] sm:$0x1] %vm751, %v722
        %p786 = scmp.eq.s32.totalorder %s32, 1
        // Predicated region
        $region69: #{tpu_custom_call.1} parent=51 // pred_check
          %p787 = pneg %p786
        $region70: #{tpu_custom_call.1} parent=51 // pred_check_branch
          %789 = sbr.rel (%p787) target = $region72
        $region71: #{tpu_custom_call.1} parent=51 // pred_region
          %v790 = vld [vmem:[#allocation3] sm:$0x1]
          %v791 = vrcp.pop %v790
          %v792 = vld [vmem:[#allocation4] sm:$0x1]
          %794 = vset.pattern.permute.xlu0 0
          %795 = vperm.xlu0 %794, %v791
          %v796 = vpop.permute.xlu0 %795
          %v798 = vlaneseq
          %v799 = vshrl.u32 %v798, 7
          %v800 = vsub.s32 0, %v799
          %v801 = vrot.slane %v796, %v800
          %v802 = vmul.f32 %v792, %v801
          %v803 = vld [vmem:[%s6] sm:$0x1]
          %v804 = vmul.f32 %v802, %v803
          %vm805 = vcmask 1040384
          %v806 = vsel %vm805, %v804, 0.0
          %807 = vadd.xlane.f32.xlu0 %v806
          %v808 = vpop.xlane.xlu0 %807
          %s809 = sld [smem:[#allocation6]]
          %v810 = vstv %s809
          %v811 = vadd.f32 %v808, %v810
          %812 = vst.msk [vmem:[%s399] sm:$0x1] %vm751, %v811
        $region72: #{tpu_custom_call.1} parent=51 // pred_fallthru
          _
        %p813 = scmp.lt.s32.totalorder %s31, 1
        %s814 = scalar_select %p813, %s31, 1
        %s815 = scalar_lea.vmem %s8, %s814
        // Predicated region
        $region73: #{tpu_custom_call.1} parent=51 // pred_check
          %p816 = pneg %p239
        $region74: #{tpu_custom_call.1} parent=51 // pred_check_branch
          %818 = sbr.rel (%p816) target = $region76
        $region75: #{tpu_custom_call.1} parent=51 // pred_region
          _
        $region76: #{tpu_custom_call.1} parent=51 // pred_fallthru
          _
      $region52: #{tpu_custom_call.1} parent=5 // pred_fallthru
        _
      %p819 = scmp.le.s32.totalorder 2, %s22
      // Predicated region
      $region77: #{tpu_custom_call.1} parent=5 // pred_check
        %p820 = pneg %p819
      $region78: #{tpu_custom_call.1} parent=5 // pred_check_branch
        %822 = sbr.rel (%p820) target = $region80
      $region79: #{tpu_custom_call.1} parent=5 // pred_region
        %s823 = ssub.s32 %s22, 2
        // Predicated region
        $region81: #{tpu_custom_call.1} parent=79 // pred_check
          %p824 = pneg %p245
        $region82: #{tpu_custom_call.1} parent=79 // pred_check_branch
          %826 = sbr.rel (%p824) target = $region84
        $region83: #{tpu_custom_call.1} parent=79 // pred_region
          %p827 = scmp.lt.s32.totalorder %s33, 1
          %s828 = scalar_select %p827, %s33, 1
          %s829 = scalar_lea.vmem %s8, %s828
        $region84: #{tpu_custom_call.1} parent=79 // pred_fallthru
          _
      $region80: #{tpu_custom_call.1} parent=5 // pred_fallthru
        _
    $region6: #{tpu_custom_call.1} parent=1 // loop_footer
      %s26 = sadd.s32 1, %s22
    $region7: #{tpu_custom_call.1} parent=1 // loop_footer_branch
      %21 = sbr.rel target = $region3
    $region8: #{tpu_custom_call.1} parent=1 // loop_exit
      _
    %830 = vsyncpa [#allocation8], 1
    %s831 = scalar_lea.sflag [#allocation8], 1
    %832 = vsyncpa %s831, 1
    %833 = vsyncpa [#allocation10], 1
    %s834 = scalar_lea.sflag [#allocation10], 1
    %835 = vsyncpa %s834, 1

</llo_original>
